<compile_context>
chip_gen: v5e
topology: v5e:2x2
jax: 0.10.0
libtpu: 0.0.40
codegen_flags: <defaults>
</compile_context>

<pallas_src>
import functools

import jax
import jax.numpy as jnp
from jax import lax
from jax.experimental import pallas as pl
from jax.experimental.pallas import tpu as pltpu

# Fixed Sobel weights -- deterministic "parameters" matching the module __init__.
KERNEL_X = ((-1.0, 0.0, 1.0), (-2.0, 0.0, 2.0), (-1.0, 0.0, 1.0))
KERNEL_Y = ((1.0, 2.0, 1.0), (0.0, 0.0, 0.0), (-1.0, -2.0, -1.0))


def _round_up(v, m):
    return (v + m - 1) // m * m


def _sobelxy_kernel(x_ref, top_ref, bot_ref, o_ref, *, compute_dtype):
    """x_ref / o_ref: (TILE_H, W); top_ref / bot_ref: (8, W) halo blocks."""
    i = pl.program_id(1)
    nt = pl.num_programs(1)

    x = x_ref[...].astype(compute_dtype)
    th, wp = x.shape

    # Lane-border masks, built once and shared by every horizontal pass
    # (broadcast over sublanes inside the selects).
    col = lax.broadcasted_iota(jnp.int32, (1, wp), 1)
    lcol = col == 0
    rcol = col == wp - 1

    def hpass(a):
        # a_l[:, c] = a[:, c-1], a_r[:, c] = a[:, c+1], zero at the lane borders.
        a_l = jnp.where(lcol, 0.0, pltpu.roll(a, 1, axis=1))
        a_r = jnp.where(rcol, 0.0, pltpu.roll(a, wp - 1, axis=1))
        # diff [-1, 0, 1] and smooth [1, 2, 1]
        return a_r - a_l, a_l + a_r + a + a

    # Halo rows (the image rows just above / below this tile); zero at the
    # image border, reproducing conv2d's padding=1.
    top = jnp.where(i > 0, top_ref[7:8, :].astype(compute_dtype), 0.0)
    bot = jnp.where(i < nt - 1, bot_ref[0:1, :].astype(compute_dtype), 0.0)
    dh_t, sh_t = hpass(top)
    dh_b, sh_b = hpass(bot)

    # Horizontal (lane) separable passes on the main tile.
    dh, sh = hpass(x)

    # Interior rows: plain sublane rolls; the wrap-around rows 0 / th-1 are
    # wrong here and get patched below with narrow 1-row ops.
    dh_up = pltpu.roll(dh, 1, axis=0)        # row r -> dh[r-1]
    dh_dn = pltpu.roll(dh, th - 1, axis=0)   # row r -> dh[r+1]
    sh_up = pltpu.roll(sh, 1, axis=0)
    sh_dn = pltpu.roll(sh, th - 1, axis=0)

    sx = dh_up + dh_dn + dh + dh             # vertical [1,2,1] of horizontal diff
    sy = sh_up - sh_dn                       # vertical [1,0,-1] of horizontal smooth
    o_ref[...] = (jnp.abs(sx) + jnp.abs(sy)).astype(o_ref.dtype)

    # Boundary-row patches: only rows 0 and th-1 need the halo contribution.
    sx0 = dh_t + dh[1:2, :] + dh[0:1, :] + dh[0:1, :]
    sy0 = sh_t - sh[1:2, :]
    o_ref[0:1, :] = (jnp.abs(sx0) + jnp.abs(sy0)).astype(o_ref.dtype)

    sxl = dh[th - 2:th - 1, :] + dh_b + dh[th - 1:th, :] + dh[th - 1:th, :]
    syl = sh[th - 2:th - 1, :] - sh_b
    o_ref[th - 1:th, :] = (jnp.abs(sxl) + jnp.abs(syl)).astype(o_ref.dtype)


def _pick_tile_h(h, wp, in_itemsize, compute_itemsize, n):
    """Choose a row-tile size (multiple of 8)."""
    h8 = _round_up(max(h, 1), 8)

    # Per-row VMEM cost: ~10 tile-sized compute-dtype temporaries live inside
    # the body plus the double-buffered input/output blocks in the I/O dtype.
    per_row = wp * (10 * compute_itemsize + 4 * in_itemsize)
    vmem_cap = 24 * 1024 * 1024  # leaves headroom inside v7x's 64 MiB VMEM
    max_rows = max(8, min(512, (vmem_cap // per_row) // 8 * 8))

    if h8 <= max_rows:
        tile_h = h8                      # whole image in one tile
    else:
        # Search multiples of 8 in [lo, max_rows]; pick the candidate that
        # minimises padded rows (ties -> largest tile).  lo >= 128 keeps the
        # 2x8-row halo over-fetch <= 12.5% whenever VMEM allows it.
        lo = min(128, max_rows)
        best_t, best_total = max_rows, _round_up(h8, max_rows)
        t = max_rows - 8
        while t >= lo:
            total = _round_up(h8, t)
            if total < best_total:
                best_t, best_total = t, total
            t -= 8
        tile_h = best_t

    # v7x megacore: with a single image, prefer an even H-tile count (>=2) so
    # the two TensorCores split the grid evenly.  Harmless on v5e/v6e.
    if n == 1 and h8 >= 16:
        nt = _round_up(h8, tile_h) // tile_h
        if nt % 2 == 1:
            t2 = _round_up(-(-h8 // (nt + 1)), 8)
            if t2 >= 8:
                tile_h = t2
    return tile_h


@functools.partial(jax.jit, static_argnames=("tile_h",))
def sobelxy(x, *, tile_h=None):
    """x: (N, 1, H, W) -> (N, 1, H, W); |sobel_x| + |sobel_y| with padding=1."""
    n, c, h, w = x.shape
    if c != 1:
        raise ValueError("Sobelxy uses a [1,1,3,3] weight -> single input channel")
    xs = x.reshape(n, h, w)

    # bf16 inputs compute in bf16 (packed vregs on v6e/v7x); everything else f32.
    compute_dtype = jnp.bfloat16 if x.dtype == jnp.bfloat16 else jnp.float32
    in_itemsize = int(jnp.dtype(x.dtype).itemsize)
    cbytes = int(jnp.dtype(compute_dtype).itemsize)

    wp = _round_up(w, 128)
    if tile_h is None:
        tile_h = _pick_tile_h(h, wp, in_itemsize, cbytes, n)
    if tile_h % 8 or tile_h < 8:
        raise ValueError("tile_h must be a multiple of 8")

    # Zero-pad H up to a multiple of tile_h and W up to a multiple of 128.
    # Extra zero rows/cols reproduce conv2d's zero padding, so the valid region
    # of the output is unchanged; padding keeps stores lane-dense and aligned.
    hp = _round_up(h, tile_h)
    if (hp, wp) != (h, w):
        xs = jnp.pad(xs, ((0, 0), (0, hp - h), (0, wp - w)))

    th8 = tile_h // 8          # halo-block stride per row tile
    n_hblk = hp // 8           # number of 8-row halo blocks along H
    n_tiles = hp // tile_h
    grid = (n, n_tiles)

    # VMEM footprint: double-buffered in/out blocks + halos + ~12 tile-sized
    # compute-dtype temporaries (margin over the ~10 actually live).
    block_bytes = tile_h * wp * in_itemsize
    halo_bytes = 8 * wp * in_itemsize
    footprint = 4 * block_bytes + 4 * halo_bytes + 12 * tile_h * wp * cbytes
    vmem_limit = int(min(max(footprint + (2 << 20), 4 << 20), 64 << 20))

    kernel = functools.partial(_sobelxy_kernel, compute_dtype=compute_dtype)

    out = pl.pallas_call(
        kernel,
        out_shape=jax.ShapeDtypeStruct((n, hp, wp), x.dtype),
        grid=grid,
        in_specs=[
            # main row tile (leading unit N dim squeezed out of the kernel view)
            pl.BlockSpec((None, tile_h, wp), lambda b, i: (b, i, 0)),
            # 8-row block just above the tile (clamped at the top edge; masked
            # to zero in-kernel when i == 0)
            pl.BlockSpec((None, 8, wp),
                         lambda b, i: (b, jnp.maximum(i * th8 - 1, 0), 0)),
            # 8-row block just below the tile (clamped at the bottom edge)
            pl.BlockSpec((None, 8, wp),
                         lambda b, i: (b, jnp.minimum((i + 1) * th8, n_hblk - 1), 0)),
        ],
        out_specs=pl.BlockSpec((None, tile_h, wp), lambda b, i: (b, i, 0)),
        compiler_params=pltpu.CompilerParams(
            dimension_semantics=("parallel", "parallel"),
            vmem_limit_bytes=vmem_limit,
        ),
        cost_estimate=pl.CostEstimate(
            flops=14 * n * hp * wp,
            transcendentals=0,
            # tile read + tile write + the two 8-row halo reads per step
            bytes_accessed=(2 * n * hp * wp + 2 * n * n_tiles * 8 * wp) * in_itemsize,
        ),
    )(xs, xs, xs)

    if (hp, wp) != (h, w):
        out = out[:, :h, :w]
    return out.reshape(n, 1, h, w)


def _sobelxy_reference(x):
    """Pure-JAX reference (lax conv) for correctness checking."""
    kx = jnp.asarray(KERNEL_X, jnp.float32).reshape(1, 1, 3, 3)
    ky = jnp.asarray(KERNEL_Y, jnp.float32).reshape(1, 1, 3, 3)
    dn = lax.conv_dimension_numbers(x.shape, kx.shape, ("NCHW", "OIHW", "NCHW"))
    xf = x.astype(jnp.float32)
    sx = lax.conv_general_dilated(xf, kx, (1, 1), ((1, 1), (1, 1)),
                                  dimension_numbers=dn)
    sy = lax.conv_general_dilated(xf, ky, (1, 1), ((1, 1), (1, 1)),
                                  dimension_numbers=dn)
    return (jnp.abs(sx) + jnp.abs(sy)).astype(x.dtype)


if __name__ == "__main__":
    key = jax.random.PRNGKey(0)
    k1, k2, k3, k4 = jax.random.split(key, 4)

    # Small, lane-dense case (single row-tile per image).
    x1 = jax.random.normal(k1, (2, 1, 16, 128), dtype=jnp.float32)
    out1 = jax.block_until_ready(sobelxy(x1))
    ref1 = _sobelxy_reference(x1)
    assert out1.shape == ref1.shape and out1.dtype == ref1.dtype
    assert jnp.allclose(out1, ref1, atol=1e-5, rtol=1e-5), "mismatch (single tile)"

    # Multi-tile case: exercises the cross-tile halo path (4 row tiles).
    x2 = jax.random.normal(k2, (1, 1, 64, 128), dtype=jnp.float32)
    out2 = jax.block_until_ready(sobelxy(x2, tile_h=16))
    ref2 = _sobelxy_reference(x2)
    assert jnp.allclose(out2, ref2, atol=1e-5, rtol=1e-5), "mismatch (multi tile)"

    # Unaligned case: exercises the wrapper pad-and-slice path.
    x3 = jax.random.normal(k3, (2, 1, 12, 96), dtype=jnp.float32)
    out3 = jax.block_until_ready(sobelxy(x3))
    ref3 = _sobelxy_reference(x3)
    assert jnp.allclose(out3, ref3, atol=1e-5, rtol=1e-5), "mismatch (padded)"

    # bf16 case: exercises the packed bf16 compute path (loose tolerance).
    x4 = jax.random.normal(k4, (1, 1, 32, 128)).astype(jnp.bfloat16)
    out4 = jax.block_until_ready(sobelxy(x4))
    ref4 = _sobelxy_reference(x4)
    assert out4.dtype == ref4.dtype
    assert jnp.allclose(out4.astype(jnp.float32), ref4.astype(jnp.float32),
                        atol=0.5, rtol=0.125), "mismatch (bf16)"

    print("KERNEL_OK")
</pallas_src>

<mosaic_0001>
module attributes {stable_mosaic.version = 11 : i64} {
  func.func @_sobelxy_kernel(%arg0: i32, %arg1: i32, %arg2: memref<1x16x128xf32, #tpu.memory_space<vmem>>, %arg3: memref<1x8x128xf32, #tpu.memory_space<vmem>>, %arg4: memref<1x8x128xf32, #tpu.memory_space<vmem>>, %arg5: memref<1x16x128xf32, #tpu.memory_space<vmem>>) attributes {dimension_semantics = [#tpu.dimension_semantics<parallel>, #tpu.dimension_semantics<parallel>], iteration_bounds = array<i64: 2, 1>, scalar_prefetch = 0 : i64, scratch_operands = 0 : i64, tpu.core_type = #tpu.core_type<tc>, window_params = [{transform_indices = @transform_0, window_bounds = array<i64: 1, 16, 128>}, {transform_indices = @transform_1, window_bounds = array<i64: 1, 8, 128>}, {transform_indices = @transform_2, window_bounds = array<i64: 1, 8, 128>}, {transform_indices = @transform_3, window_bounds = array<i64: 1, 16, 128>}]} {
    %c0 = arith.constant 0 : index
    %c0_0 = arith.constant 0 : index
    %c0_1 = arith.constant 0 : index
    %0 = vector.load %arg2[%c0, %c0_0, %c0_1] : memref<1x16x128xf32, #tpu.memory_space<vmem>>, vector<1x16x128xf32>
    %1 = vector.shape_cast %0 : vector<1x16x128xf32> to vector<16x128xf32>
    %2 = tpu.iota {dimensions = array<i32: 1>} : vector<1x128xi32>
    %c0_i32 = arith.constant 0 : i32
    %3 = vector.broadcast %c0_i32 : i32 to vector<1x128xi32>
    %4 = arith.cmpi eq, %2, %3 : vector<1x128xi32>
    %c127_i32 = arith.constant 127 : i32
    %5 = vector.broadcast %c127_i32 : i32 to vector<1x128xi32>
    %6 = arith.cmpi eq, %2, %5 : vector<1x128xi32>
    %c0_i32_2 = arith.constant 0 : i32
    %7 = arith.cmpi sgt, %arg1, %c0_i32_2 : i32
    %c0_3 = arith.constant 0 : index
    %c7 = arith.constant 7 : index
    %c0_4 = arith.constant 0 : index
    %8 = vector.load %arg3[%c0_3, %c7, %c0_4] : memref<1x8x128xf32, #tpu.memory_space<vmem>>, vector<1x1x128xf32>
    %9 = vector.shape_cast %8 : vector<1x1x128xf32> to vector<1x128xf32>
    %cst = arith.constant 0.000000e+00 : f32
    %10 = vector.broadcast %cst : f32 to vector<1x128xf32>
    %11 = arith.select %7, %9, %10 : vector<1x128xf32>
    %c0_i32_5 = arith.constant 0 : i32
    %12 = arith.cmpi slt, %arg1, %c0_i32_5 : i32
    %c0_6 = arith.constant 0 : index
    %c0_7 = arith.constant 0 : index
    %c0_8 = arith.constant 0 : index
    %13 = vector.load %arg4[%c0_6, %c0_7, %c0_8] : memref<1x8x128xf32, #tpu.memory_space<vmem>>, vector<1x1x128xf32>
    %14 = vector.shape_cast %13 : vector<1x1x128xf32> to vector<1x128xf32>
    %cst_9 = arith.constant 0.000000e+00 : f32
    %15 = vector.broadcast %cst_9 : f32 to vector<1x128xf32>
    %16 = arith.select %12, %14, %15 : vector<1x128xf32>
    %c1_i32 = arith.constant 1 : i32
    %17 = tpu.dynamic_rotate %11 by %c1_i32 dim 1 : vector<1x128xf32>, i32 -> vector<1x128xf32>
    %cst_10 = arith.constant 0.000000e+00 : f32
    %18 = vector.broadcast %cst_10 : f32 to vector<1x128xf32>
    %19 = arith.select %4, %18, %17 : vector<1x128xi1>, vector<1x128xf32>
    %c127_i32_11 = arith.constant 127 : i32
    %20 = tpu.dynamic_rotate %11 by %c127_i32_11 dim 1 : vector<1x128xf32>, i32 -> vector<1x128xf32>
    %cst_12 = arith.constant 0.000000e+00 : f32
    %21 = vector.broadcast %cst_12 : f32 to vector<1x128xf32>
    %22 = arith.select %6, %21, %20 : vector<1x128xi1>, vector<1x128xf32>
    %23 = arith.subf %22, %19 : vector<1x128xf32>
    %24 = arith.addf %19, %22 : vector<1x128xf32>
    %25 = arith.addf %24, %11 : vector<1x128xf32>
    %26 = arith.addf %25, %11 : vector<1x128xf32>
    %c1_i32_13 = arith.constant 1 : i32
    %27 = tpu.dynamic_rotate %16 by %c1_i32_13 dim 1 : vector<1x128xf32>, i32 -> vector<1x128xf32>
    %cst_14 = arith.constant 0.000000e+00 : f32
    %28 = vector.broadcast %cst_14 : f32 to vector<1x128xf32>
    %29 = arith.select %4, %28, %27 : vector<1x128xi1>, vector<1x128xf32>
    %c127_i32_15 = arith.constant 127 : i32
    %30 = tpu.dynamic_rotate %16 by %c127_i32_15 dim 1 : vector<1x128xf32>, i32 -> vector<1x128xf32>
    %cst_16 = arith.constant 0.000000e+00 : f32
    %31 = vector.broadcast %cst_16 : f32 to vector<1x128xf32>
    %32 = arith.select %6, %31, %30 : vector<1x128xi1>, vector<1x128xf32>
    %33 = arith.subf %32, %29 : vector<1x128xf32>
    %34 = arith.addf %29, %32 : vector<1x128xf32>
    %35 = arith.addf %34, %16 : vector<1x128xf32>
    %36 = arith.addf %35, %16 : vector<1x128xf32>
    %c1_i32_17 = arith.constant 1 : i32
    %37 = tpu.dynamic_rotate %1 by %c1_i32_17 dim 1 : vector<16x128xf32>, i32 -> vector<16x128xf32>
    %cst_18 = arith.constant 0.000000e+00 : f32
    %38 = vector.shape_cast %4 : vector<1x128xi1> to vector<1x128xi1>
    %39 = vector.broadcast %38 : vector<1x128xi1> to vector<16x128xi1>
    %40 = vector.broadcast %cst_18 : f32 to vector<16x128xf32>
    %41 = arith.select %39, %40, %37 : vector<16x128xi1>, vector<16x128xf32>
    %c127_i32_19 = arith.constant 127 : i32
    %42 = tpu.dynamic_rotate %1 by %c127_i32_19 dim 1 : vector<16x128xf32>, i32 -> vector<16x128xf32>
    %cst_20 = arith.constant 0.000000e+00 : f32
    %43 = vector.shape_cast %6 : vector<1x128xi1> to vector<1x128xi1>
    %44 = vector.broadcast %43 : vector<1x128xi1> to vector<16x128xi1>
    %45 = vector.broadcast %cst_20 : f32 to vector<16x128xf32>
    %46 = arith.select %44, %45, %42 : vector<16x128xi1>, vector<16x128xf32>
    %47 = arith.subf %46, %41 : vector<16x128xf32>
    %48 = arith.addf %41, %46 : vector<16x128xf32>
    %49 = arith.addf %48, %1 : vector<16x128xf32>
    %50 = arith.addf %49, %1 : vector<16x128xf32>
    %c1_i32_21 = arith.constant 1 : i32
    %51 = tpu.dynamic_rotate %47 by %c1_i32_21 dim 0 : vector<16x128xf32>, i32 -> vector<16x128xf32>
    %c15_i32 = arith.constant 15 : i32
    %52 = tpu.dynamic_rotate %47 by %c15_i32 dim 0 : vector<16x128xf32>, i32 -> vector<16x128xf32>
    %c1_i32_22 = arith.constant 1 : i32
    %53 = tpu.dynamic_rotate %50 by %c1_i32_22 dim 0 : vector<16x128xf32>, i32 -> vector<16x128xf32>
    %c15_i32_23 = arith.constant 15 : i32
    %54 = tpu.dynamic_rotate %50 by %c15_i32_23 dim 0 : vector<16x128xf32>, i32 -> vector<16x128xf32>
    %55 = arith.addf %51, %52 : vector<16x128xf32>
    %56 = arith.addf %55, %47 : vector<16x128xf32>
    %57 = arith.addf %56, %47 : vector<16x128xf32>
    %58 = arith.subf %53, %54 : vector<16x128xf32>
    %59 = math.absf %57 : vector<16x128xf32>
    %60 = math.absf %58 : vector<16x128xf32>
    %61 = arith.addf %59, %60 : vector<16x128xf32>
    %c0_24 = arith.constant 0 : index
    %c0_25 = arith.constant 0 : index
    %c0_26 = arith.constant 0 : index
    %62 = vector.load %arg5[%c0_24, %c0_25, %c0_26] : memref<1x16x128xf32, #tpu.memory_space<vmem>>, vector<1x16x128xf32>
    %63 = vector.shape_cast %62 : vector<1x16x128xf32> to vector<16x128xf32>
    %64 = vector.shape_cast %61 : vector<16x128xf32> to vector<1x16x128xf32>
    tpu.vector_store %arg5[%c0_24, %c0_25, %c0_26], %64 {strides = array<i32>} : memref<1x16x128xf32, #tpu.memory_space<vmem>>, vector<1x16x128xf32>,
    %65 = vector.extract_strided_slice %47 {offsets = [1, 0], sizes = [1, 128], strides = [1, 1]} : vector<16x128xf32> to vector<1x128xf32>
    %66 = arith.addf %23, %65 : vector<1x128xf32>
    %67 = vector.extract_strided_slice %47 {offsets = [0, 0], sizes = [1, 128], strides = [1, 1]} : vector<16x128xf32> to vector<1x128xf32>
    %68 = arith.addf %66, %67 : vector<1x128xf32>
    %69 = vector.extract_strided_slice %47 {offsets = [0, 0], sizes = [1, 128], strides = [1, 1]} : vector<16x128xf32> to vector<1x128xf32>
    %70 = arith.addf %68, %69 : vector<1x128xf32>
    %71 = vector.extract_strided_slice %50 {offsets = [1, 0], sizes = [1, 128], strides = [1, 1]} : vector<16x128xf32> to vector<1x128xf32>
    %72 = arith.subf %26, %71 : vector<1x128xf32>
    %73 = math.absf %70 : vector<1x128xf32>
    %74 = math.absf %72 : vector<1x128xf32>
    %75 = arith.addf %73, %74 : vector<1x128xf32>
    %c0_27 = arith.constant 0 : index
    %c0_28 = arith.constant 0 : index
    %c0_29 = arith.constant 0 : index
    %76 = vector.load %arg5[%c0_27, %c0_28, %c0_29] : memref<1x16x128xf32, #tpu.memory_space<vmem>>, vector<1x1x128xf32>
    %77 = vector.shape_cast %76 : vector<1x1x128xf32> to vector<1x128xf32>
    %78 = vector.shape_cast %75 : vector<1x128xf32> to vector<1x1x128xf32>
    tpu.vector_store %arg5[%c0_27, %c0_28, %c0_29], %78 {strides = array<i32>} : memref<1x16x128xf32, #tpu.memory_space<vmem>>, vector<1x1x128xf32>,
    %79 = vector.extract_strided_slice %47 {offsets = [14, 0], sizes = [1, 128], strides = [1, 1]} : vector<16x128xf32> to vector<1x128xf32>
    %80 = arith.addf %79, %33 : vector<1x128xf32>
    %81 = vector.extract_strided_slice %47 {offsets = [15, 0], sizes = [1, 128], strides = [1, 1]} : vector<16x128xf32> to vector<1x128xf32>
    %82 = arith.addf %80, %81 : vector<1x128xf32>
    %83 = vector.extract_strided_slice %47 {offsets = [15, 0], sizes = [1, 128], strides = [1, 1]} : vector<16x128xf32> to vector<1x128xf32>
    %84 = arith.addf %82, %83 : vector<1x128xf32>
    %85 = vector.extract_strided_slice %50 {offsets = [14, 0], sizes = [1, 128], strides = [1, 1]} : vector<16x128xf32> to vector<1x128xf32>
    %86 = arith.subf %85, %36 : vector<1x128xf32>
    %87 = math.absf %84 : vector<1x128xf32>
    %88 = math.absf %86 : vector<1x128xf32>
    %89 = arith.addf %87, %88 : vector<1x128xf32>
    %c0_30 = arith.constant 0 : index
    %c15 = arith.constant 15 : index
    %c0_31 = arith.constant 0 : index
    %90 = vector.load %arg5[%c0_30, %c15, %c0_31] : memref<1x16x128xf32, #tpu.memory_space<vmem>>, vector<1x1x128xf32>
    %91 = vector.shape_cast %90 : vector<1x1x128xf32> to vector<1x128xf32>
    %92 = vector.shape_cast %89 : vector<1x128xf32> to vector<1x1x128xf32>
    tpu.vector_store %arg5[%c0_30, %c15, %c0_31], %92 {strides = array<i32>} : memref<1x16x128xf32, #tpu.memory_space<vmem>>, vector<1x1x128xf32>,
    return
  }
  func.func @transform_0(%arg0: i32, %arg1: i32) -> (i32, i32, i32) {
    %c0_i32 = arith.constant 0 : i32
    %c0_i32_0 = arith.constant 0 : i32
    return %arg0, %arg1, %c0_i32 : i32, i32, i32
  }
  func.func @transform_1(%arg0: i32, %arg1: i32) -> (i32, i32, i32) {
    %c2_i32 = arith.constant 2 : i32
    %0 = arith.muli %arg1, %c2_i32 : i32
    %c1_i32 = arith.constant 1 : i32
    %1 = arith.subi %0, %c1_i32 : i32
    %c0_i32 = arith.constant 0 : i32
    %2 = arith.maxsi %1, %c0_i32 : i32
    %c0_i32_0 = arith.constant 0 : i32
    %c0_i32_1 = arith.constant 0 : i32
    return %arg0, %2, %c0_i32_0 : i32, i32, i32
  }
  func.func @transform_2(%arg0: i32, %arg1: i32) -> (i32, i32, i32) {
    %c1_i32 = arith.constant 1 : i32
    %0 = arith.addi %arg1, %c1_i32 : i32
    %c2_i32 = arith.constant 2 : i32
    %1 = arith.muli %0, %c2_i32 : i32
    %c1_i32_0 = arith.constant 1 : i32
    %2 = arith.minsi %1, %c1_i32_0 : i32
    %c0_i32 = arith.constant 0 : i32
    %c0_i32_1 = arith.constant 0 : i32
    return %arg0, %2, %c0_i32 : i32, i32, i32
  }
  func.func @transform_3(%arg0: i32, %arg1: i32) -> (i32, i32, i32) {
    %c0_i32 = arith.constant 0 : i32
    %c0_i32_0 = arith.constant 0 : i32
    return %arg0, %arg1, %c0_i32 : i32, i32, i32
  }
}

</mosaic_0001>

<llo_original>
// kernel: sobelxy.1
$region0: #{sobelxy.1}
  #allocation0 [shape = 'u32[]', space=smem, size = 0x4, offset = 0x4, fixed_abs, tag = 'smem constant byte address 0x4 - core index']
  #allocation1 [shape = 'u32[72,128]{1,0:T(1,128)}', space=vmem, size = 0x9000, scoped, tag = 'internal scratch']
  %s0 = inlined_call_operand.hbm [shape: f32[2,16,128], index: 0, kind: input, shape index: {}, may-alias: {0,1,2}]
  %s1 = inlined_call_operand.hbm [shape: f32[2,16,128], index: 1, kind: input, shape index: {}, may-alias: {0,1,2}]
  %s2 = inlined_call_operand.hbm [shape: f32[2,16,128], index: 2, kind: input, shape index: {}, may-alias: {0,1,2}]
  %s3 = inlined_call_operand.hbm [shape: f32[2,16,128], index: 3, kind: output, shape index: {}]
  %s4 = sld [smem:[#allocation0]]
  $region57: #{sobelxy.1} parent=0
    _
  %s6 = ssub.s32 1, %s4
  %s7 = scalar_select 0, %s6, %s4
  $region1: #{sobelxy.1} parent=0
    #allocation2 [shape = 'u8[16384]{0}', space=vmem, size = 0x4000, scoped, tag = 'input window, operand 0']
    #allocation3 [shape = 's32[2]{0}', space=sflag, size = 0x8, scoped, tag = 'scoped memory for sobelxy.1']
    #allocation4 [shape = 's32[2]{0}', space=sflag, size = 0x8, scoped, tag = 'scoped memory for sobelxy.1']
    #allocation5 [shape = 'u8[8192]{0}', space=vmem, size = 0x2000, scoped, tag = 'input window, operand 1']
    #allocation6 [shape = 's32[2]{0}', space=sflag, size = 0x8, scoped, tag = 'scoped memory for sobelxy.1']
    #allocation7 [shape = 'u8[8192]{0}', space=vmem, size = 0x2000, scoped, tag = 'input window, operand 2']
    #allocation8 [shape = 'u8[16384]{0}', space=vmem, size = 0x4000, scoped, tag = 'output window, operand 0']
    %8 = vsyncpa [#allocation3], 0
    %s9 = scalar_lea.sflag [#allocation3], 1
    %10 = vsyncpa %s9, 0
    %11 = vsyncpa [#allocation6], 0
    %s12 = scalar_lea.sflag [#allocation6], 1
    %13 = vsyncpa %s12, 0
    %14 = vsyncpa [#allocation4], 0
    %s15 = scalar_lea.sflag [#allocation4], 1
    %16 = vsyncpa %s15, 0
    loop: start=0, step=1, limit=4
    $region2: #{sobelxy.1} parent=1 // loop_pre_header
      _
    $region3: #{sobelxy.1} parent=1 // loop_header
      %s18 = sphi 0, %s22
      %p19 = scmp.ge.s32.totalorder %s18, 4
      %s25 = sphi 0, %s37
      %s26 = sphi 0, %s33
      %s27 = sphi 0, %s25
      %s28 = sphi 0, %s26
      %s29 = sphi 0, %s27
      %s30 = sphi 0, %s28
      %s42 = sphi 0, %s44
      %s45 = sphi 0, %s42
      %s46 = sphi 0, %s45
      %s62 = sphi 0, %s46
      %s78 = sphi 0, %s80
      %s81 = sphi 0, %s78
      %s82 = sphi 0, %s81
      %s98 = sphi 0, %s82
      %s114 = sphi 0, %s116
      %s117 = sphi 0, %s114
      %s118 = sphi 0, %s117
      %s134 = sphi 0, %s118
      %s142 = sphi 0, %s144
      %s145 = sphi 0, %s142
      %s146 = sphi 0, %s145
      %s162 = sphi 0, %s146
    $region4: #{sobelxy.1} parent=1 // loop_header_branch
      %21 = sbr.rel (%p19) target = $region8
    $region5: #{sobelxy.1} parent=1 // loop_body
      %s23 = ssub.s32 %s18, 1
      %s24 = ssub.s32 %s18, 2
      %s31 = sadd.s32 1, %s26
      %p32 = scmp.ge.s32.totalorder %s31, 1
      %s33 = scalar_select %p32, 0, %s31
      %s34 = sadd.s32 1, %s25
      %s35 = scalar_select %p32, %s34, %s25
      %p36 = scmp.ge.s32.totalorder %s35, 2
      %s37 = scalar_select %p36, 0, %s35
      %s38 = ssub.s32 %s25, %s37
      %s39 = ssub.s32 %s26, %s33
      %s40 = sor.u32 %s38, %s39
      %p41 = scmp.eq.s32.totalorder %s40, 0
      %s43 = sadd.s32 %s42, 1
      %s44 = scalar_select %p41, %s42, %s43
      %p47 = pneg %p41
      %p48 = scmp.eq.s32.totalorder %s18, 1
      %p49 = por %p47, %p48
      %p50 = scmp.ne.s32.totalorder %s42, %s45
      %p51 = scmp.eq.s32.totalorder %s18, 0
      %p52 = por %p50, %p51
      %p53 = scmp.ne.s32.totalorder %s42, %s45
      %p54 = scmp.eq.s32.totalorder %s23, 1
      %p55 = por %p53, %p54
      %p56 = scmp.ne.s32.totalorder %s45, %s46
      %p57 = scmp.eq.s32.totalorder %s23, 0
      %p58 = por %p56, %p57
      %p59 = scmp.ne.s32.totalorder %s45, %s46
      %p60 = scmp.eq.s32.totalorder %s24, 1
      %p61 = por %p59, %p60
      %p63 = scmp.ne.s32.totalorder %s46, %s62
      %p64 = scmp.eq.s32.totalorder %s24, 0
      %p65 = por %p63, %p64
      %s66 = smul.u32 %s26, 2
      %s67 = ssub.s32 %s66, 1
      %p68 = scmp.gt.s32.totalorder %s67, 0
      %s69 = scalar_select %p68, %s67, 0
      %s70 = smul.u32 %s33, 2
      %s71 = ssub.s32 %s70, 1
      %p72 = scmp.gt.s32.totalorder %s71, 0
      %s73 = scalar_select %p72, %s71, 0
      %s74 = ssub.s32 %s25, %s37
      %s75 = ssub.s32 %s69, %s73
      %s76 = sor.u32 %s74, %s75
      %p77 = scmp.eq.s32.totalorder %s76, 0
      %s79 = sadd.s32 %s78, 1
      %s80 = scalar_select %p77, %s78, %s79
      %p83 = pneg %p77
      %p84 = scmp.eq.s32.totalorder %s18, 1
      %p85 = por %p83, %p84
      %p86 = scmp.ne.s32.totalorder %s78, %s81
      %p87 = scmp.eq.s32.totalorder %s18, 0
      %p88 = por %p86, %p87
      %p89 = scmp.ne.s32.totalorder %s78, %s81
      %p90 = scmp.eq.s32.totalorder %s23, 1
      %p91 = por %p89, %p90
      %p92 = scmp.ne.s32.totalorder %s81, %s82
      %p93 = scmp.eq.s32.totalorder %s23, 0
      %p94 = por %p92, %p93
      %p95 = scmp.ne.s32.totalorder %s81, %s82
      %p96 = scmp.eq.s32.totalorder %s24, 1
      %p97 = por %p95, %p96
      %p99 = scmp.ne.s32.totalorder %s82, %s98
      %p100 = scmp.eq.s32.totalorder %s24, 0
      %p101 = por %p99, %p100
      %s102 = sadd.s32 %s26, 1
      %s103 = smul.u32 %s102, 2
      %p104 = scmp.lt.s32.totalorder %s103, 1
      %s105 = scalar_select %p104, %s103, 1
      %s106 = sadd.s32 %s33, 1
      %s107 = smul.u32 %s106, 2
      %p108 = scmp.lt.s32.totalorder %s107, 1
      %s109 = scalar_select %p108, %s107, 1
      %s110 = ssub.s32 %s25, %s37
      %s111 = ssub.s32 %s105, %s109
      %s112 = sor.u32 %s110, %s111
      %p113 = scmp.eq.s32.totalorder %s112, 0
      %s115 = sadd.s32 %s114, 1
      %s116 = scalar_select %p113, %s114, %s115
      %p119 = pneg %p113
      %p120 = scmp.eq.s32.totalorder %s18, 1
      %p121 = por %p119, %p120
      %p122 = scmp.ne.s32.totalorder %s114, %s117
      %p123 = scmp.eq.s32.totalorder %s18, 0
      %p124 = por %p122, %p123
      %p125 = scmp.ne.s32.totalorder %s114, %s117
      %p126 = scmp.eq.s32.totalorder %s23, 1
      %p127 = por %p125, %p126
      %p128 = scmp.ne.s32.totalorder %s117, %s118
      %p129 = scmp.eq.s32.totalorder %s23, 0
      %p130 = por %p128, %p129
      %p131 = scmp.ne.s32.totalorder %s117, %s118
      %p132 = scmp.eq.s32.totalorder %s24, 1
      %p133 = por %p131, %p132
      %p135 = scmp.ne.s32.totalorder %s118, %s134
      %p136 = scmp.eq.s32.totalorder %s24, 0
      %p137 = por %p135, %p136
      %s138 = ssub.s32 %s25, %s37
      %s139 = ssub.s32 %s26, %s33
      %s140 = sor.u32 %s138, %s139
      %p141 = scmp.eq.s32.totalorder %s140, 0
      %s143 = sadd.s32 %s142, 1
      %s144 = scalar_select %p141, %s142, %s143
      %p147 = pneg %p141
      %p148 = scmp.eq.s32.totalorder %s18, 1
      %p149 = por %p147, %p148
      %p150 = scmp.ne.s32.totalorder %s142, %s145
      %p151 = scmp.eq.s32.totalorder %s18, 0
      %p152 = por %p150, %p151
      %p153 = scmp.ne.s32.totalorder %s142, %s145
      %p154 = scmp.eq.s32.totalorder %s23, 1
      %p155 = por %p153, %p154
      %p156 = scmp.ne.s32.totalorder %s145, %s146
      %p157 = scmp.eq.s32.totalorder %s23, 0
      %p158 = por %p156, %p157
      %p159 = scmp.ne.s32.totalorder %s145, %s146
      %p160 = scmp.eq.s32.totalorder %s24, 1
      %p161 = por %p159, %p160
      %p163 = scmp.ne.s32.totalorder %s146, %s162
      %p164 = scmp.eq.s32.totalorder %s24, 0
      %p165 = por %p163, %p164
      %p166 = scmp.le.s32.totalorder 1, %s18
      %p167 = scmp.lt.s32.totalorder %s18, 3
      %p168 = pnand %p166, %p167
      %p169 = pneg %p168
      // Predicated region
      $region9: #{sobelxy.1} parent=5 // pred_check
        _
      $region10: #{sobelxy.1} parent=5 // pred_check_branch
        %171 = sbr.rel (%p168) target = $region12
      $region11: #{sobelxy.1} parent=5 // pred_region
        %s172 = ssub.s32 %s18, 1
      $region12: #{sobelxy.1} parent=5 // pred_fallthru
        _
      %p173 = scmp.lt.s32.totalorder %s18, 2
      // Predicated region
      $region13: #{sobelxy.1} parent=5 // pred_check
        %p174 = pneg %p173
      $region14: #{sobelxy.1} parent=5 // pred_check_branch
        %176 = sbr.rel (%p174) target = $region16
      $region15: #{sobelxy.1} parent=5 // pred_region
        // Predicated region
        $region17: #{sobelxy.1} parent=15 // pred_check
          %p177 = pneg %p52
        $region18: #{sobelxy.1} parent=15 // pred_check_branch
          %179 = sbr.rel (%p177) target = $region20
        $region19: #{sobelxy.1} parent=15 // pred_region
          %s180 = sand.u32 %s42, 1
          %s181 = scalar_lea.sflag [#allocation3], %s180
          %s182 = sand.u32 %s42, 1
          %s183 = smul.addr %s182, 16
          %s184 = scalar_lea.vmem [#allocation2], %s183
          %s185 = smul.u32 2, %s26
          %187 = vsyncadd %s181, 0
          %s188 = smul.addr %s25, 2
          %s189 = sadd.s32 %s185, %s188
          %s190 = smul.addr %s189, 8
          %s191 = scalar_lea.hbm %s0, %s190
          %s192 = sshll.u32 %s191, 4
          %s193 = int_to_ptr.hbm [resolvable:$true] %s192
          %s194 = sshll.u32 %s184, 4
          %s195 = int_to_ptr.vmem [resolvable:$true] %s194
          %200 = dma.hbm_to_vmem [thread:$0]  %s193, 256, %s195, %s181, 128, 128, 8
        $region20: #{sobelxy.1} parent=15 // pred_fallthru
          _
        // Predicated region
        $region21: #{sobelxy.1} parent=15 // pred_check
          %p201 = pneg %p88
        $region22: #{sobelxy.1} parent=15 // pred_check_branch
          %203 = sbr.rel (%p201) target = $region24
        $region23: #{sobelxy.1} parent=15 // pred_region
          %s204 = sand.u32 %s18, 1
          %s205 = scalar_lea.sflag [#allocation6], %s204
          %s206 = sand.u32 %s78, 1
          %s207 = smul.addr %s206, 8
          %s208 = scalar_lea.vmem [#allocation5], %s207
          %s209 = smul.u32 %s26, 2
          %s210 = ssub.s32 %s209, 1
          %p211 = scmp.gt.s32.totalorder %s210, 0
          %s212 = scalar_select %p211, %s210, 0
          %214 = vsyncadd %s205, 0
          %s215 = smul.addr %s25, 2
          %s216 = sadd.s32 %s212, %s215
          %s217 = smul.addr %s216, 8
          %s218 = scalar_lea.hbm %s1, %s217
          %s220 = sshll.u32 %s218, 4
          %s221 = int_to_ptr.hbm [resolvable:$true] %s220
          %s222 = sshll.u32 %s208, 4
          %s223 = int_to_ptr.vmem [resolvable:$true] %s222
          %225 = dma.hbm_to_vmem [thread:$0]  %s221, 128, %s223, %s205
        $region24: #{sobelxy.1} parent=15 // pred_fallthru
          _
        // Predicated region
        $region25: #{sobelxy.1} parent=15 // pred_check
          %p226 = pneg %p124
        $region26: #{sobelxy.1} parent=15 // pred_check_branch
          %228 = sbr.rel (%p226) target = $region28
        $region27: #{sobelxy.1} parent=15 // pred_region
          %s229 = sand.u32 %s18, 1
          %s230 = scalar_lea.sflag [#allocation6], %s229
          %s231 = sand.u32 %s114, 1
          %s232 = smul.addr %s231, 8
          %s233 = scalar_lea.vmem [#allocation7], %s232
          %s234 = sadd.s32 %s26, 1
          %s235 = smul.u32 %s234, 2
          %p236 = scmp.lt.s32.totalorder %s235, 1
          %s237 = scalar_select %p236, %s235, 1
          %239 = vsyncadd %s230, 0
          %s240 = smul.addr %s25, 2
          %s241 = sadd.s32 %s237, %s240
          %s242 = smul.addr %s241, 8
          %s243 = scalar_lea.hbm %s2, %s242
          %s245 = sshll.u32 %s243, 4
          %s246 = int_to_ptr.hbm [resolvable:$true] %s245
          %s247 = sshll.u32 %s233, 4
          %s248 = int_to_ptr.vmem [resolvable:$true] %s247
          %250 = dma.hbm_to_vmem [thread:$0]  %s246, 128, %s248, %s230
        $region28: #{sobelxy.1} parent=15 // pred_fallthru
          _
      $region16: #{sobelxy.1} parent=5 // pred_fallthru
        _
      %p251 = scmp.le.s32.totalorder 1, %s18
      %p252 = scmp.lt.s32.totalorder %s18, 3
      %p253 = pnand %p251, %p252
      %p254 = pneg %p253
      // Predicated region
      $region29: #{sobelxy.1} parent=5 // pred_check
        _
      $region30: #{sobelxy.1} parent=5 // pred_check_branch
        %256 = sbr.rel (%p253) target = $region32
      $region31: #{sobelxy.1} parent=5 // pred_region
        %s257 = ssub.s32 %s18, 1
        %s258 = sand.u32 %s45, 1
        %s259 = scalar_lea.sflag [#allocation3], %s258
        %s260 = sand.u32 %s45, 1
        %s261 = smul.addr %s260, 16
        %s262 = scalar_lea.vmem [#allocation2], %s261
        // Predicated region
        $region33: #{sobelxy.1} parent=31 // pred_check
          %p263 = pneg %p58
        $region34: #{sobelxy.1} parent=31 // pred_check_branch
          %265 = sbr.rel (%p263) target = $region36
        $region35: #{sobelxy.1} parent=31 // pred_region
          %267 = dma.done %s259, 256
        $region36: #{sobelxy.1} parent=31 // pred_fallthru
          _
        %s268 = sand.u32 %s23, 1
        %s269 = scalar_lea.sflag [#allocation6], %s268
        %s270 = sand.u32 %s81, 1
        %s271 = smul.addr %s270, 8
        %s272 = scalar_lea.vmem [#allocation5], %s271
        // Predicated region
        $region37: #{sobelxy.1} parent=31 // pred_check
          %p273 = pneg %p94
        $region38: #{sobelxy.1} parent=31 // pred_check_branch
          %275 = sbr.rel (%p273) target = $region40
        $region39: #{sobelxy.1} parent=31 // pred_region
          %277 = dma.done %s269, 128
        $region40: #{sobelxy.1} parent=31 // pred_fallthru
          _
        %s278 = sand.u32 %s23, 1
        %s279 = scalar_lea.sflag [#allocation6], %s278
        %s280 = sand.u32 %s117, 1
        %s281 = smul.addr %s280, 8
        %s282 = scalar_lea.vmem [#allocation7], %s281
        // Predicated region
        $region41: #{sobelxy.1} parent=31 // pred_check
          %p283 = pneg %p130
        $region42: #{sobelxy.1} parent=31 // pred_check_branch
          %285 = sbr.rel (%p283) target = $region44
        $region43: #{sobelxy.1} parent=31 // pred_region
          %287 = dma.done %s279, 128
        $region44: #{sobelxy.1} parent=31 // pred_fallthru
          _
        %s288 = sand.u32 %s45, 1
        %s289 = scalar_lea.sflag [#allocation3], %s288
        %s290 = sand.u32 %s45, 1
        %s291 = smul.addr %s290, 16
        %s292 = scalar_lea.vmem [#allocation2], %s291
        %p293 = pneg %p58
        %p294 = pneg %p55
        %s295 = sand.u32 %s23, 1
        %s296 = scalar_lea.sflag [#allocation6], %s295
        %s297 = sand.u32 %s81, 1
        %s298 = smul.addr %s297, 8
        %s299 = scalar_lea.vmem [#allocation5], %s298
        %p300 = pneg %p94
        %p301 = pneg %p91
        %s302 = sand.u32 %s23, 1
        %s303 = scalar_lea.sflag [#allocation6], %s302
        %s304 = sand.u32 %s117, 1
        %s305 = smul.addr %s304, 8
        %s306 = scalar_lea.vmem [#allocation7], %s305
        %p307 = pneg %p130
        %p308 = pneg %p127
        %p309 = pneg %p158
        %p310 = pneg %p155
        %s311 = sand.u32 %s145, 1
        %s312 = scalar_lea.sflag [#allocation4], %s311
        %s313 = sand.u32 %s145, 1
        %s314 = smul.addr %s313, 16
        %s315 = scalar_lea.vmem [#allocation8], %s314
        %s316 = smul.u32 2, %s28
        %s317 = smul.u32 %s28, 2
        %s318 = ssub.s32 %s317, 1
        %p319 = scmp.gt.s32.totalorder %s318, 0
        %s320 = scalar_select %p319, %s318, 0
        %s321 = sadd.s32 %s28, 1
        %s322 = smul.u32 %s321, 2
        %p323 = scmp.lt.s32.totalorder %s322, 1
        %s324 = scalar_select %p323, %s322, 1
        %s325 = smul.u32 2, %s28
        %v326 = vld [vmem:[%s262] sm:$0xff]
        %v327 = vld [vmem:[%s262 + $0x8] sm:$0xff]
        %v328 = vlaneseq
        %v329 = vand.u32 %v328, 127
        %vm330 = vcmp.eq.s32.totalorder %v329, 0
        %vm331 = vcmp.eq.s32.totalorder %v329, 127
        %p332 = scmp.gt.s32.totalorder %s28, 0
        %v333 = vld [vmem:[%s272 + $0x7] sm:$0x1]
        %s334 = scalar_select %p332, 1, 0
        %v335 = vstv %s334
        %vm336 = vcmp.eq.s32.totalorder %v335, 1
        %v337 = vsel %vm336, %v333, 0.0
        %p338 = scmp.lt.s32.totalorder %s28, 0
        %v339 = vld [vmem:[%s282] sm:$0x1]
        %s340 = scalar_select %p338, 1, 0
        %v341 = vstv %s340
        %vm342 = vcmp.eq.s32.totalorder %v341, 1
        %v343 = vsel %vm342, %v339, 0.0
        %344 = vrot.lane.b32.xlu0 %v337, 1
        %v345 = vpop.permute.xlu0 %344
        %v346 = vsel %vm330, 0.0, %v345
        %347 = vrot.lane.b32.xlu0 %v337, 127
        %v348 = vpop.permute.xlu0 %347
        %v349 = vsel %vm331, 0.0, %v348
        %v350 = vsub.f32 %v349, %v346
        %v351 = vadd.f32 %v346, %v349
        %v352 = vadd.f32 %v351, %v337
        %v353 = vadd.f32 %v352, %v337
        %354 = vrot.lane.b32.xlu0 %v343, 1
        %v355 = vpop.permute.xlu0 %354
        %v356 = vsel %vm330, 0.0, %v355
        %357 = vrot.lane.b32.xlu0 %v343, 127
        %v358 = vpop.permute.xlu0 %357
        %v359 = vsel %vm331, 0.0, %v358
        %v360 = vsub.f32 %v359, %v356
        %v361 = vadd.f32 %v356, %v359
        %v362 = vadd.f32 %v361, %v343
        %v363 = vadd.f32 %v362, %v343
        %364 = vrot.lane.b32.xlu0 %v326, 1
        %v365 = vpop.permute.xlu0 %364
        %366 = vrot.lane.b32.xlu0 %v327, 1
        %v367 = vpop.permute.xlu0 %366
        %v368 = vsel %vm330, 1, 0
        %vm369 = vcmp.eq.s32.totalorder %v368, 1
        %v370 = vsel %vm369, 0.0, %v365
        %v371 = vsel %vm369, 0.0, %v367
        %372 = vrot.lane.b32.xlu0 %v326, 127
        %v373 = vpop.permute.xlu0 %372
        %374 = vrot.lane.b32.xlu0 %v327, 127
        %v375 = vpop.permute.xlu0 %374
        %v376 = vsel %vm331, 1, 0
        %vm377 = vcmp.eq.s32.totalorder %v376, 1
        %v378 = vsel %vm377, 0.0, %v373
        %v379 = vsel %vm377, 0.0, %v375
        %v380 = vsub.f32 %v378, %v370
        %v381 = vsub.f32 %v379, %v371
        %v382 = vadd.f32 %v370, %v378
        %v383 = vadd.f32 %v371, %v379
        %v384 = vadd.f32 %v382, %v326
        %v385 = vadd.f32 %v383, %v327
        %v386 = vadd.f32 %v384, %v326
        %v387 = vadd.f32 %v385, %v327
        %v388 = vrot.slane %v380, 7
        %v389 = vrot.slane %v381, 7
        %v390 = vlaneseq
        %v391 = vshrl.u32 %v390, 7
        %vm392 = vcmp.lt.s32.totalorder %v391, 1
        %v393 = vsel %vm392, %v388, %v389
        %v394 = vsel %vm392, %v389, %v388
        %v395 = vrot.slane %v380, 1
        %v396 = vrot.slane %v381, 1
        %vm397 = vcmp.lt.s32.totalorder %v391, 7
        %v398 = vsel %vm397, %v395, %v396
        %v399 = vsel %vm397, %v396, %v395
        %v400 = vrot.slane %v386, 7
        %v401 = vrot.slane %v387, 7
        %v402 = vsel %vm392, %v400, %v401
        %v403 = vsel %vm392, %v401, %v400
        %v404 = vrot.slane %v386, 1
        %v405 = vrot.slane %v387, 1
        %v406 = vsel %vm397, %v404, %v405
        %v407 = vsel %vm397, %v405, %v404
        %v408 = vadd.f32 %v394, %v398
        %v409 = vadd.f32 %v393, %v399
        %v410 = vadd.f32 %v408, %v380
        %v411 = vadd.f32 %v409, %v381
        %v412 = vadd.f32 %v410, %v380
        %v413 = vadd.f32 %v411, %v381
        %v414 = vsub.f32 %v403, %v406
        %v415 = vsub.f32 %v402, %v407
        %v416 = vand.u32 2147483647, %v412
        %v417 = vand.u32 2147483647, %v413
        %v418 = vand.u32 2147483647, %v414
        %v419 = vand.u32 2147483647, %v415
        %v420 = vadd.f32 %v416, %v418
        %v421 = vadd.f32 %v417, %v419
        %422 = vst [vmem:[%s315] sm:$0xff] %v420
        %423 = vst [vmem:[%s315 + $0x8] sm:$0xff] %v421
        %v425 = vrot.slane %v380, 1
        %v427 = vadd.f32 %v350, %v425
        %v428 = vadd.f32 %v427, %v380
        %v429 = vadd.f32 %v428, %v380
        %v431 = vrot.slane %v386, 1
        %v433 = vsub.f32 %v353, %v431
        %v434 = vand.u32 2147483647, %v429
        %v435 = vand.u32 2147483647, %v433
        %v436 = vadd.f32 %v434, %v435
        %437 = vst [vmem:[%s315] sm:$0x1] %v436
        %v439 = vrot.slane %v360, 2
        %v441 = vadd.f32 %v381, %v439
        %v443 = vrot.slane %v381, 1
        %v445 = vadd.f32 %v441, %v443
        %v446 = vadd.f32 %v445, %v443
        %v448 = vrot.slane %v363, 2
        %v450 = vsub.f32 %v387, %v448
        %v451 = vand.u32 2147483647, %v446
        %v452 = vand.u32 2147483647, %v450
        %v453 = vadd.f32 %v451, %v452
        %454 = vst [vmem:[%s315 + $0x9] sm:$0x40] %v453
        %s455 = sand.u32 %s145, 1
        %s456 = scalar_lea.sflag [#allocation4], %s455
        %s457 = sand.u32 %s145, 1
        %s458 = smul.addr %s457, 16
        %s459 = scalar_lea.vmem [#allocation8], %s458
        // Predicated region
        $region45: #{sobelxy.1} parent=31 // pred_check
          %p460 = pneg %p155
        $region46: #{sobelxy.1} parent=31 // pred_check_branch
          %462 = sbr.rel (%p460) target = $region48
        $region47: #{sobelxy.1} parent=31 // pred_region
          %s463 = smul.u32 2, %s28
          %465 = vsyncadd %s456, 0
          %s466 = smul.addr %s27, 2
          %s467 = sadd.s32 %s463, %s466
          %s468 = smul.addr %s467, 8
          %s469 = scalar_lea.hbm %s3, %s468
          %s470 = sshll.u32 %s459, 4
          %s471 = int_to_ptr.vmem [resolvable:$true] %s470
          %s472 = sshll.u32 %s469, 4
          %s473 = int_to_ptr.hbm [resolvable:$true] %s472
          %478 = dma.vmem_to_hbm [thread:$0]  %s471, 256, %s473, %s456, 128, 128, 8
        $region48: #{sobelxy.1} parent=31 // pred_fallthru
          _
      $region32: #{sobelxy.1} parent=5 // pred_fallthru
        _
      %p479 = scmp.le.s32.totalorder 2, %s18
      // Predicated region
      $region49: #{sobelxy.1} parent=5 // pred_check
        %p480 = pneg %p479
      $region50: #{sobelxy.1} parent=5 // pred_check_branch
        %482 = sbr.rel (%p480) target = $region52
      $region51: #{sobelxy.1} parent=5 // pred_region
        %s483 = ssub.s32 %s18, 2
        // Predicated region
        $region53: #{sobelxy.1} parent=51 // pred_check
          %p484 = pneg %p161
        $region54: #{sobelxy.1} parent=51 // pred_check_branch
          %486 = sbr.rel (%p484) target = $region56
        $region55: #{sobelxy.1} parent=51 // pred_region
          %s487 = sand.u32 %s146, 1
          %s488 = scalar_lea.sflag [#allocation4], %s487
          %s489 = sand.u32 %s146, 1
          %s490 = smul.addr %s489, 16
          %s491 = scalar_lea.vmem [#allocation8], %s490
          %493 = dma.done %s488, 256
        $region56: #{sobelxy.1} parent=51 // pred_fallthru
          _
      $region52: #{sobelxy.1} parent=5 // pred_fallthru
        _
    $region6: #{sobelxy.1} parent=1 // loop_footer
      %s22 = sadd.s32 1, %s18
    $region7: #{sobelxy.1} parent=1 // loop_footer_branch
      %17 = sbr.rel target = $region3
    $region8: #{sobelxy.1} parent=1 // loop_exit
      _
    %494 = vsyncpa [#allocation3], 1
    %s495 = scalar_lea.sflag [#allocation3], 1
    %496 = vsyncpa %s495, 1
    %497 = vsyncpa [#allocation6], 1
    %s498 = scalar_lea.sflag [#allocation6], 1
    %499 = vsyncpa %s498, 1
    %500 = vsyncpa [#allocation4], 1
    %s501 = scalar_lea.sflag [#allocation4], 1
    %502 = vsyncpa %s501, 1

</llo_original>
